<compile_context>
chip_gen: v7x
topology: tpu7x:2x2x1
jax: 0.10.0
libtpu: 0.0.40
codegen_flags: <defaults>
</compile_context>

<pallas_src>
import functools

import jax
import jax.numpy as jnp
from jax.experimental import pallas as pl
from jax.experimental.pallas import tpu as pltpu


def _round_up(x, m):
    return ((x + m - 1) // m) * m


def _online_layer_kernel(x_ref, w_ref, b_ref, g_ref, bt_ref, carry_ref,
                         out_ref, fifo_out_ref, carry_scr,
                         *, lb, fifo_size, kernel_size, stride, pad, eps):
    blk = pl.program_id(0)

    # Seed the temporal carry on the first block.  Layout: (pad, Dout) with the
    # real (fifo_size-1) past-s rows, oldest first, in the LAST rows (sublane
    # aligned); leading rows are never read.
    @pl.when(blk == 0)
    def _():
        carry_scr[...] = carry_ref[...]

    prev = carry_scr[...]                                   # (pad, Dout) f32

    # Fused 1x1-conv + graph conv + partition sum + bias for the whole frame
    # block: a single lane-dense bf16 MXU matmul, f32 accumulate.
    x_f32 = x_ref[...]                                      # (lb, C_in*V) f32
    s_blk = jnp.dot(x_f32.astype(jnp.bfloat16), w_ref[...],
                    preferred_element_type=jnp.float32) + b_ref[...]

    # Dilated temporal FIFO sum t[l] = sum_k s[l - k*stride], computed from
    # registers via static shifted slices of [carry | s_blk] (no VMEM slab).
    s_ext = jnp.concatenate([prev, s_blk], axis=0)          # (pad+lb, Dout)
    t = s_blk                                               # k == 0 tap
    for k in range(1, kernel_size):
        start = pad - k * stride
        t = t + s_ext[start:start + lb, :]

    # Per-frame LayerNorm over the (C_out*V) lane axis, two-pass statistics.
    n = t.shape[-1]
    mean = jnp.sum(t, axis=-1, keepdims=True) * (1.0 / n)
    d = t - mean
    var = jnp.sum(d * d, axis=-1, keepdims=True) * (1.0 / n)
    tn = d * jax.lax.rsqrt(var + eps)
    y1 = jnp.maximum(tn * g_ref[...] + bt_ref[...], 0.0)    # LN affine + ReLU

    # Identity residual add + final ReLU (Dropout is identity at inference).
    out_ref[...] = jnp.maximum(y1 + x_f32, 0.0)

    # Export the final FIFO state on the last block: ONE contiguous store of
    # the last fifo_size s rows, oldest first (wrapper reverses).
    @pl.when(blk == pl.num_programs(0) - 1)
    def _():
        fifo_out_ref[...] = s_ext[pad + lb - fifo_size:pad + lb, :]

    # Carry the last `pad` s rows forward to the next frame block.
    @pl.when(blk < pl.num_programs(0) - 1)
    def _():
        carry_scr[...] = s_ext[lb:lb + pad, :]


def fold_online_layer_params(conv_w, conv_b, A, ln_gamma, ln_beta,
                             *, num_partitions):
    """Fold conv weight + adjacency (+ bias) into one lane-dense weight.

    Call ONCE at layer init (hoisted out of the per-call forward):
      W_fold[ci*V + w, c*V + v] = sum_p W[p*C_out + c, ci] * A[p, w, v]
      b_fold[c*V + v]           = sum_p b[p*C_out + c] * sum_w A[p, w, v]
    (edge_importance is ones; forward() never folds it into A.)
    """
    P = num_partitions
    PC, C_in = conv_w.shape
    C_out = PC // P
    V = A.shape[-1]
    Din, Dout = C_in * V, C_out * V
    w_p = conv_w.reshape(P, C_out, C_in)
    w_fold = jnp.einsum('pki,pwv->iwkv', w_p, A).reshape(Din, Dout)
    b_fold = jnp.einsum('pk,pv->kv', conv_b.reshape(P, C_out),
                        A.sum(axis=1)).reshape(1, Dout)
    return (w_fold.astype(jnp.bfloat16),      # bf16-native MXU on v5e/v6e/v7x
            b_fold.astype(jnp.float32),
            ln_gamma.reshape(1, Dout).astype(jnp.float32),
            ln_beta.reshape(1, Dout).astype(jnp.float32))


def online_layer_forward_flat(x_flat, carry0_pad, params, *,
                              kernel_size, stride, fifo_size):
    """Lane-dense forward.

    x_flat:     (L, C_in*V) float32, frame-major, (channel, joint) on lanes.
    carry0_pad: (pad, C_out*V) past s rows, oldest first, real rows at the end.
    Returns (out_flat (L, C_out*V), fifo_flat (F, C_out*V) OLDEST first).
    """
    w_fold, b_fold, gamma, beta = params
    L, Din = x_flat.shape
    Dout = w_fold.shape[1]
    F = fifo_size
    pad = carry0_pad.shape[0]

    # Frame-block size: one block at streaming sizes, else <=2048-frame blocks
    # (large blocks keep the sequential-grid DMA hidden on v5e's lower HBM BW;
    # still only a few MiB of VMEM on v7x's 64 MiB).
    if L <= 2048 or L % 8 != 0:
        lb = L
    else:
        lb = 2048
        while L % lb != 0:
            lb -= 8
    num_blocks = L // lb

    kernel = functools.partial(
        _online_layer_kernel,
        lb=lb, fifo_size=F, kernel_size=kernel_size, stride=stride,
        pad=pad, eps=1e-5)

    grid_spec = pltpu.PrefetchScalarGridSpec(
        num_scalar_prefetch=0,
        grid=(num_blocks,),
        in_specs=[
            pl.BlockSpec((lb, Din), lambda b: (b, 0)),        # x frame block
            pl.BlockSpec((Din, Dout), lambda b: (0, 0)),      # folded weight (bf16)
            pl.BlockSpec((1, Dout), lambda b: (0, 0)),        # folded bias
            pl.BlockSpec((1, Dout), lambda b: (0, 0)),        # LN gamma
            pl.BlockSpec((1, Dout), lambda b: (0, 0)),        # LN beta
            pl.BlockSpec((pad, Dout), lambda b: (0, 0)),      # temporal carry seed
        ],
        out_specs=[
            pl.BlockSpec((lb, Dout), lambda b: (b, 0)),       # output frame block
            pl.BlockSpec((F, Dout), lambda b: (0, 0)),        # final FIFO (oldest 1st)
        ],
        scratch_shapes=[pltpu.VMEM((pad, Dout), jnp.float32)],
    )

    out_flat, fifo_flat = pl.pallas_call(
        kernel,
        grid_spec=grid_spec,
        out_shape=(jax.ShapeDtypeStruct((L, Dout), jnp.float32),
                   jax.ShapeDtypeStruct((F, Dout), jnp.float32)),
        compiler_params=pltpu.CompilerParams(
            dimension_semantics=("arbitrary",)),
    )(x_flat, w_fold, b_fold, gamma, beta, carry0_pad)
    return out_flat, fifo_flat


def online_layer_forward(x, params, fifo0, *, kernel_size, stride):
    """x: (1, C_in, L, V) f32; fifo0: (F, C_out, V) newest first.

    Returns (out (1, C_out, L, V), final FIFO (F, C_out, V) newest first).
    """
    N, C_in, L, V = x.shape
    assert N == 1, "AggregateStgcn FIFO state is batch-1"
    F, C_out, _ = fifo0.shape
    assert F == stride * (kernel_size - 1) + 1
    assert kernel_size % 2 == 1 and kernel_size >= 3
    assert C_in == C_out and stride == 1, "identity-residual configuration only"
    Dout = C_out * V
    carry = F - 1
    pad = _round_up(max(carry, 1), 8)

    # TODO(synk): in a multi-layer model keep activations in this lane-dense
    # (L, C*V) layout between layers so these transposes disappear entirely.
    x_flat = jnp.transpose(x[0], (1, 0, 2)).reshape(L, C_in * V)
    # Temporal carry seed: s rows of frames -1..-(F-1) == fifo0[:F-1] reversed,
    # padded (with never-read zeros) at the front to a sublane-aligned block.
    carry_rows = fifo0.reshape(F, Dout)[F - 2::-1]
    carry0_pad = jnp.zeros((pad, Dout), jnp.float32).at[pad - carry:].set(carry_rows)

    out_flat, fifo_flat = online_layer_forward_flat(
        x_flat, carry0_pad, params,
        kernel_size=kernel_size, stride=stride, fifo_size=F)

    out = jnp.transpose(out_flat.reshape(L, C_out, V), (1, 0, 2))[None]
    fifo_out = fifo_flat[::-1].reshape(F, C_out, V)     # newest first
    return out, fifo_out


def reference_forward(x, conv_w, conv_b, A, ln_gamma, ln_beta, fifo0,
                      kernel_size, stride, num_partitions):
    """Pure-JAX transcription of the PyTorch OnlineLayer.forward (identity residual)."""
    N, C_in, L, V = x.shape
    P = num_partitions
    C_out = conv_w.shape[0] // P
    F = fifo0.shape[0]
    res = x                                                          # identity residual
    # 1x1 conv
    y = jnp.einsum('oc,nclv->nolv', conv_w, x) + conv_b[None, :, None, None]
    # AggregateStgcn: split / stack / permute / matmul(A) / sum over P
    z = y.reshape(N, P, C_out, L, V).transpose(0, 3, 1, 2, 4)        # (N, L, P, C, V)
    z = jnp.einsum('nlpcw,pwv->nlpcv', z, A)
    s = z.sum(axis=2)                                                # (N, L, C, V)
    fifo = fifo0[None]                                               # (1, F, C, V)
    outs = []
    for i in range(L):
        fifo = jnp.concatenate([s[:, i:i + 1], fifo[:, :F - 1]], axis=1)
        outs.append(fifo[:, ::stride].sum(axis=1))
    t = jnp.stack(outs, axis=2)                                      # (N, C, L, V)
    # LayerNorm([C_out, 1, V]) per frame + ReLU
    mean = t.mean(axis=(1, 3), keepdims=True)
    var = ((t - mean) ** 2).mean(axis=(1, 3), keepdims=True)
    tn = (t - mean) / jnp.sqrt(var + 1e-5)
    ln = tn * ln_gamma[None] + ln_beta[None]
    y1 = jnp.maximum(ln, 0.0)
    out = jnp.maximum(y1 + res, 0.0)                                 # add, then do = ReLU∘Dropout(eval)
    return out, fifo[0]


if __name__ == "__main__":
    # Module config (identity-residual case): in_channels == out_channels, stride == 1.
    N, C_in, L, V = 1, 8, 8, 16
    C_out, P = 8, 3
    kernel_size, stride = 3, 1
    fifo_size = stride * (kernel_size - 1) + 1

    key = jax.random.PRNGKey(0)
    k_x, k_w, k_b, k_a, k_f = jax.random.split(key, 5)
    x = jax.random.normal(k_x, (N, C_in, L, V), dtype=jnp.float32)
    # nn.Conv2d(in_channels, out_channels * num_partitions, kernel_size=1)
    conv_w = 0.1 * jax.random.normal(k_w, (C_out * P, C_in), dtype=jnp.float32)
    conv_b = 0.1 * jax.random.normal(k_b, (C_out * P,), dtype=jnp.float32)
    # graph adjacency (P, V, V); edge_importance == ones is only folded in by eval_()
    A = jax.random.uniform(k_a, (P, V, V), dtype=jnp.float32)
    # LayerNorm([C_out, 1, V]) affine params (PyTorch default init)
    ln_gamma = jnp.ones((C_out, 1, V), dtype=jnp.float32)
    ln_beta = jnp.zeros((C_out, 1, V), dtype=jnp.float32)
    # FIFO state: module initializes it to zeros; use a non-zero state here to
    # emulate mid-stream operation and exercise the temporal boundary path.
    fifo0 = 0.1 * jax.random.normal(k_f, (fifo_size, C_out, V), dtype=jnp.float32)

    # Weight/bias folding is hoisted out of the per-call forward (done once here).
    params = fold_online_layer_params(conv_w, conv_b, A, ln_gamma, ln_beta,
                                      num_partitions=P)
    params = jax.tree_util.tree_map(jax.block_until_ready, params)

    fwd = jax.jit(functools.partial(online_layer_forward,
                                    kernel_size=kernel_size, stride=stride))
    out, fifo_out = fwd(x, params, fifo0)
    out = jax.block_until_ready(out)
    fifo_out = jax.block_until_ready(fifo_out)

    ref_out, ref_fifo = reference_forward(
        x, conv_w, conv_b, A, ln_gamma, ln_beta, fifo0,
        kernel_size, stride, P)

    assert out.shape == (N, C_out, L, V)
    assert fifo_out.shape == (fifo_size, C_out, V)
    # bf16 MXU matmul -> loosened tolerance vs the f32 reference.
    assert jnp.allclose(out, ref_out, atol=3e-2, rtol=3e-2), \
        float(jnp.max(jnp.abs(out - ref_out)))
    assert jnp.allclose(fifo_out, ref_fifo, atol=3e-2, rtol=3e-2), \
        float(jnp.max(jnp.abs(fifo_out - ref_fifo)))
    print("KERNEL_OK")
</pallas_src>

<mosaic_0001>
module attributes {stable_mosaic.version = 11 : i64} {
  func.func @_online_layer_kernel(%arg0: i32, %arg1: memref<8x128xf32, #tpu.memory_space<vmem>>, %arg2: memref<128x128xbf16, #tpu.memory_space<vmem>>, %arg3: memref<1x128xf32, #tpu.memory_space<vmem>>, %arg4: memref<1x128xf32, #tpu.memory_space<vmem>>, %arg5: memref<1x128xf32, #tpu.memory_space<vmem>>, %arg6: memref<8x128xf32, #tpu.memory_space<vmem>>, %arg7: memref<8x128xf32, #tpu.memory_space<vmem>>, %arg8: memref<3x128xf32, #tpu.memory_space<vmem>>, %arg9: memref<8x128xf32, #tpu.memory_space<vmem>>) attributes {dimension_semantics = [#tpu.dimension_semantics<arbitrary>], iteration_bounds = array<i64: 1>, scalar_prefetch = 0 : i64, scratch_operands = 1 : i64, tpu.core_type = #tpu.core_type<tc>, window_params = [{transform_indices = @transform_0, window_bounds = array<i64: 8, 128>}, {pipeline_mode = #tpu.pipeline_mode<synchronous>, transform_indices = @transform_1, window_bounds = array<i64: 128, 128>}, {pipeline_mode = #tpu.pipeline_mode<synchronous>, transform_indices = @transform_2, window_bounds = array<i64: 1, 128>}, {pipeline_mode = #tpu.pipeline_mode<synchronous>, transform_indices = @transform_3, window_bounds = array<i64: 1, 128>}, {pipeline_mode = #tpu.pipeline_mode<synchronous>, transform_indices = @transform_4, window_bounds = array<i64: 1, 128>}, {pipeline_mode = #tpu.pipeline_mode<synchronous>, transform_indices = @transform_5, window_bounds = array<i64: 8, 128>}, {transform_indices = @transform_6, window_bounds = array<i64: 8, 128>}, {pipeline_mode = #tpu.pipeline_mode<synchronous>, transform_indices = @transform_7, window_bounds = array<i64: 3, 128>}]} {
    %c0_i32 = arith.constant 0 : i32
    %0 = arith.cmpi eq, %arg0, %c0_i32 : i32
    %1 = arith.extui %0 : i1 to i32
    %c0_i32_0 = arith.constant 0 : i32
    %2 = arith.cmpi ne, %1, %c0_i32_0 : i32
    scf.if %2 {
      %c0_25 = arith.constant 0 : index
      %c0_26 = arith.constant 0 : index
      %50 = vector.load %arg6[%c0_25, %c0_26] : memref<8x128xf32, #tpu.memory_space<vmem>>, vector<8x128xf32>
      %c0_27 = arith.constant 0 : index
      %c0_28 = arith.constant 0 : index
      %51 = vector.load %arg9[%c0_27, %c0_28] : memref<8x128xf32, #tpu.memory_space<vmem>>, vector<8x128xf32>
      tpu.vector_store %arg9[%c0_27, %c0_28], %50 {strides = array<i32>} : memref<8x128xf32, #tpu.memory_space<vmem>>, vector<8x128xf32>,
    } else {
    }
    %c0 = arith.constant 0 : index
    %c0_1 = arith.constant 0 : index
    %3 = vector.load %arg9[%c0, %c0_1] : memref<8x128xf32, #tpu.memory_space<vmem>>, vector<8x128xf32>
    %c0_2 = arith.constant 0 : index
    %c0_3 = arith.constant 0 : index
    %4 = vector.load %arg1[%c0_2, %c0_3] : memref<8x128xf32, #tpu.memory_space<vmem>>, vector<8x128xf32>
    %5 = arith.truncf %4 : vector<8x128xf32> to vector<8x128xbf16>
    %c0_4 = arith.constant 0 : index
    %c0_5 = arith.constant 0 : index
    %6 = vector.load %arg2[%c0_4, %c0_5] : memref<128x128xbf16, #tpu.memory_space<vmem>>, vector<128x128xbf16>
    %cst = arith.constant dense<0.000000e+00> : vector<8x128xf32>
    %7 = tpu.matmul %5, %6, %cst {dimension_numbers = #tpu.dot_dimension_numbers<[1], [0], [0], [1], [0, 0, 1, 1], [], []>} : vector<8x128xbf16>, vector<128x128xbf16>, vector<8x128xf32> -> vector<8x128xf32>
    %c0_6 = arith.constant 0 : index
    %c0_7 = arith.constant 0 : index
    %8 = vector.load %arg3[%c0_6, %c0_7] : memref<1x128xf32, #tpu.memory_space<vmem>>, vector<1x128xf32>
    %9 = vector.broadcast %8 : vector<1x128xf32> to vector<8x128xf32>
    %10 = arith.addf %7, %9 : vector<8x128xf32>
    %11 = tpu.concatenate %3, %10 in 0 : vector<8x128xf32>, vector<8x128xf32> -> vector<16x128xf32>
    %12 = vector.extract_strided_slice %11 {offsets = [7, 0], sizes = [8, 128], strides = [1, 1]} : vector<16x128xf32> to vector<8x128xf32>
    %13 = arith.addf %10, %12 : vector<8x128xf32>
    %14 = vector.extract_strided_slice %11 {offsets = [6, 0], sizes = [8, 128], strides = [1, 1]} : vector<16x128xf32> to vector<8x128xf32>
    %15 = arith.addf %13, %14 : vector<8x128xf32>
    %cst_8 = arith.constant dense<0.000000e+00> : vector<8xf32>
    %16 = vector.multi_reduction <add>, %15, %cst_8 [1] : vector<8x128xf32> to vector<8xf32>
    %17 = vector.shape_cast %16 : vector<8xf32> to vector<8x1xf32>
    %cst_9 = arith.constant 7.812500e-03 : f32
    %18 = vector.broadcast %cst_9 : f32 to vector<8x1xf32>
    %19 = arith.mulf %17, %18 : vector<8x1xf32>
    %20 = vector.broadcast %19 : vector<8x1xf32> to vector<8x128xf32>
    %21 = arith.subf %15, %20 : vector<8x128xf32>
    %22 = arith.mulf %21, %21 : vector<8x128xf32>
    %cst_10 = arith.constant dense<0.000000e+00> : vector<8xf32>
    %23 = vector.multi_reduction <add>, %22, %cst_10 [1] : vector<8x128xf32> to vector<8xf32>
    %24 = vector.shape_cast %23 : vector<8xf32> to vector<8x1xf32>
    %cst_11 = arith.constant 7.812500e-03 : f32
    %25 = vector.broadcast %cst_11 : f32 to vector<8x1xf32>
    %26 = arith.mulf %24, %25 : vector<8x1xf32>
    %cst_12 = arith.constant 9.99999974E-6 : f32
    %27 = vector.broadcast %cst_12 : f32 to vector<8x1xf32>
    %28 = arith.addf %26, %27 : vector<8x1xf32>
    %29 = math.rsqrt %28 : vector<8x1xf32>
    %30 = vector.broadcast %29 : vector<8x1xf32> to vector<8x128xf32>
    %31 = arith.mulf %21, %30 : vector<8x128xf32>
    %c0_13 = arith.constant 0 : index
    %c0_14 = arith.constant 0 : index
    %32 = vector.load %arg4[%c0_13, %c0_14] : memref<1x128xf32, #tpu.memory_space<vmem>>, vector<1x128xf32>
    %33 = vector.broadcast %32 : vector<1x128xf32> to vector<8x128xf32>
    %34 = arith.mulf %31, %33 : vector<8x128xf32>
    %c0_15 = arith.constant 0 : index
    %c0_16 = arith.constant 0 : index
    %35 = vector.load %arg5[%c0_15, %c0_16] : memref<1x128xf32, #tpu.memory_space<vmem>>, vector<1x128xf32>
    %36 = vector.broadcast %35 : vector<1x128xf32> to vector<8x128xf32>
    %37 = arith.addf %34, %36 : vector<8x128xf32>
    %cst_17 = arith.constant 0.000000e+00 : f32
    %38 = vector.broadcast %cst_17 : f32 to vector<8x128xf32>
    %39 = arith.maximumf %37, %38 : vector<8x128xf32>
    %40 = arith.addf %39, %4 : vector<8x128xf32>
    %cst_18 = arith.constant 0.000000e+00 : f32
    %41 = vector.broadcast %cst_18 : f32 to vector<8x128xf32>
    %42 = arith.maximumf %40, %41 : vector<8x128xf32>
    %c0_19 = arith.constant 0 : index
    %c0_20 = arith.constant 0 : index
    %43 = vector.load %arg7[%c0_19, %c0_20] : memref<8x128xf32, #tpu.memory_space<vmem>>, vector<8x128xf32>
    tpu.vector_store %arg7[%c0_19, %c0_20], %42 {strides = array<i32>} : memref<8x128xf32, #tpu.memory_space<vmem>>, vector<8x128xf32>,
    %c0_i32_21 = arith.constant 0 : i32
    %44 = arith.cmpi eq, %arg0, %c0_i32_21 : i32
    %45 = arith.extui %44 : i1 to i32
    %c0_i32_22 = arith.constant 0 : i32
    %46 = arith.cmpi ne, %45, %c0_i32_22 : i32
    scf.if %46 {
      %50 = vector.extract_strided_slice %11 {offsets = [13, 0], sizes = [3, 128], strides = [1, 1]} : vector<16x128xf32> to vector<3x128xf32>
      %c0_25 = arith.constant 0 : index
      %c0_26 = arith.constant 0 : index
      %51 = vector.load %arg8[%c0_25, %c0_26] : memref<3x128xf32, #tpu.memory_space<vmem>>, vector<3x128xf32>
      tpu.vector_store %arg8[%c0_25, %c0_26], %50 {strides = array<i32>} : memref<3x128xf32, #tpu.memory_space<vmem>>, vector<3x128xf32>,
    } else {
    }
    %c0_i32_23 = arith.constant 0 : i32
    %47 = arith.cmpi slt, %arg0, %c0_i32_23 : i32
    %48 = arith.extui %47 : i1 to i32
    %c0_i32_24 = arith.constant 0 : i32
    %49 = arith.cmpi ne, %48, %c0_i32_24 : i32
    scf.if %49 {
      %50 = vector.extract_strided_slice %11 {offsets = [8, 0], sizes = [8, 128], strides = [1, 1]} : vector<16x128xf32> to vector<8x128xf32>
      %c0_25 = arith.constant 0 : index
      %c0_26 = arith.constant 0 : index
      %51 = vector.load %arg9[%c0_25, %c0_26] : memref<8x128xf32, #tpu.memory_space<vmem>>, vector<8x128xf32>
      tpu.vector_store %arg9[%c0_25, %c0_26], %50 {strides = array<i32>} : memref<8x128xf32, #tpu.memory_space<vmem>>, vector<8x128xf32>,
    } else {
    }
    return
  }
  func.func @transform_0(%arg0: i32) -> (i32, i32) {
    %c0_i32 = arith.constant 0 : i32
    %c0_i32_0 = arith.constant 0 : i32
    return %arg0, %c0_i32 : i32, i32
  }
  func.func @transform_1(%arg0: i32) -> (i32, i32) {
    %c0_i32 = arith.constant 0 : i32
    %c0_i32_0 = arith.constant 0 : i32
    %c0_i32_1 = arith.constant 0 : i32
    return %c0_i32, %c0_i32_0 : i32, i32
  }
  func.func @transform_2(%arg0: i32) -> (i32, i32) {
    %c0_i32 = arith.constant 0 : i32
    %c0_i32_0 = arith.constant 0 : i32
    %c0_i32_1 = arith.constant 0 : i32
    return %c0_i32, %c0_i32_0 : i32, i32
  }
  func.func @transform_3(%arg0: i32) -> (i32, i32) {
    %c0_i32 = arith.constant 0 : i32
    %c0_i32_0 = arith.constant 0 : i32
    %c0_i32_1 = arith.constant 0 : i32
    return %c0_i32, %c0_i32_0 : i32, i32
  }
  func.func @transform_4(%arg0: i32) -> (i32, i32) {
    %c0_i32 = arith.constant 0 : i32
    %c0_i32_0 = arith.constant 0 : i32
    %c0_i32_1 = arith.constant 0 : i32
    return %c0_i32, %c0_i32_0 : i32, i32
  }
  func.func @transform_5(%arg0: i32) -> (i32, i32) {
    %c0_i32 = arith.constant 0 : i32
    %c0_i32_0 = arith.constant 0 : i32
    %c0_i32_1 = arith.constant 0 : i32
    return %c0_i32, %c0_i32_0 : i32, i32
  }
  func.func @transform_6(%arg0: i32) -> (i32, i32) {
    %c0_i32 = arith.constant 0 : i32
    %c0_i32_0 = arith.constant 0 : i32
    return %arg0, %c0_i32 : i32, i32
  }
  func.func @transform_7(%arg0: i32) -> (i32, i32) {
    %c0_i32 = arith.constant 0 : i32
    %c0_i32_0 = arith.constant 0 : i32
    %c0_i32_1 = arith.constant 0 : i32
    return %c0_i32, %c0_i32_0 : i32, i32
  }
}

</mosaic_0001>

<llo_original>
// kernel: online_layer_forward.1
$region0: #{online_layer_forward.1}
  #allocation0 [shape = 'u32[]', space=smem, size = 0x4, offset = 0x4, fixed_abs, tag = 'smem constant byte address 0x4 - core index']
  #allocation1 [shape = 'u32[144,128]{1,0:T(1,128)}', space=vmem, size = 0x12000, scoped, tag = 'internal scratch']
  #allocation2 [shape = 'f32[8,128]{1,0:T(8,128)}', space=vmem, size = 0x1000, scoped, tag = 'scratch operand']
  %s0 = inlined_call_operand.vmem [shape: f32[8,128], index: 0, kind: input, shape index: {}]
  %s1 = inlined_call_operand.vmem [shape: bf16[128,128], index: 1, kind: input, shape index: {}]
  %s2 = inlined_call_operand.vmem [shape: f32[1,128], index: 2, kind: input, shape index: {}]
  %s3 = inlined_call_operand.vmem [shape: f32[1,128], index: 3, kind: input, shape index: {}]
  %s4 = inlined_call_operand.vmem [shape: f32[1,128], index: 4, kind: input, shape index: {}]
  %s5 = inlined_call_operand.vmem [shape: f32[8,128], index: 5, kind: input, shape index: {}]
  %s6 = inlined_call_operand.vmem [shape: f32[8,128], index: 6, kind: output, shape index: {0}]
  %s7 = inlined_call_operand.vmem [shape: f32[3,128], index: 7, kind: output, shape index: {1}]
  %8 = xla_tuple %s6, %s7
  %s9 = sld [smem:[#allocation0]]
  $region54: #{online_layer_forward.1} parent=0
    _
  %s11 = ssub.s32 1, %s9
  %s12 = scalar_select 0, %s11, %s9
  // Predicated region
  $region2: #{online_layer_forward.1} parent=0 // pred_check
    _
  $region3: #{online_layer_forward.1} parent=0 // pred_check_branch
    %14 = sbr.rel (0) target = $region5
  $region4: #{online_layer_forward.1} parent=0 // pred_region
    _
  $region5: #{online_layer_forward.1} parent=0 // pred_fallthru
    _
  // Predicated region
  $region6: #{online_layer_forward.1} parent=0 // pred_check
    _
  $region7: #{online_layer_forward.1} parent=0 // pred_check_branch
    %16 = sbr.rel (0) target = $region9
  $region8: #{online_layer_forward.1} parent=0 // pred_region
    _
  $region9: #{online_layer_forward.1} parent=0 // pred_fallthru
    _
  // Predicated region
  $region10: #{online_layer_forward.1} parent=0 // pred_check
    _
  $region11: #{online_layer_forward.1} parent=0 // pred_check_branch
    %18 = sbr.rel (0) target = $region13
  $region12: #{online_layer_forward.1} parent=0 // pred_region
    _
  $region13: #{online_layer_forward.1} parent=0 // pred_fallthru
    _
  // Predicated region
  $region14: #{online_layer_forward.1} parent=0 // pred_check
    _
  $region15: #{online_layer_forward.1} parent=0 // pred_check_branch
    %20 = sbr.rel (0) target = $region17
  $region16: #{online_layer_forward.1} parent=0 // pred_region
    _
  $region17: #{online_layer_forward.1} parent=0 // pred_fallthru
    _
  // Predicated region
  $region18: #{online_layer_forward.1} parent=0 // pred_check
    _
  $region19: #{online_layer_forward.1} parent=0 // pred_check_branch
    %22 = sbr.rel (0) target = $region21
  $region20: #{online_layer_forward.1} parent=0 // pred_region
    _
  $region21: #{online_layer_forward.1} parent=0 // pred_fallthru
    _
  // Predicated region
  $region22: #{online_layer_forward.1} parent=0 // pred_check
    _
  $region23: #{online_layer_forward.1} parent=0 // pred_check_branch
    %24 = sbr.rel (0) target = $region25
  $region24: #{online_layer_forward.1} parent=0 // pred_region
    _
  $region25: #{online_layer_forward.1} parent=0 // pred_fallthru
    _
  %p26 = scmp.eq.s32.totalorder 0, 0
  // Predicated region
  $region26: #{online_layer_forward.1} parent=0 // pred_check
    %p27 = pneg %p26
  $region27: #{online_layer_forward.1} parent=0 // pred_check_branch
    %29 = sbr.rel (%p27) target = $region29
  $region28: #{online_layer_forward.1} parent=0 // pred_region
    %v30 = vld [vmem:[%s5] sm:$0xff]
    %31 = vst [vmem:[#allocation2] sm:$0xff] %v30
  $region29: #{online_layer_forward.1} parent=0 // pred_fallthru
    _
  %v32 = vld [vmem:[#allocation2] sm:$0xff]
  %v33 = vld [vmem:[%s0] sm:$0xff]
  %v34 = vpack.c.bf16 %v33, %v33
  %v35 = vld [vmem:[%s1] sm:$0xf]
  %v36 = vld [vmem:[%s1 + $0x4] sm:$0xf]
  %v37 = vld [vmem:[%s1 + $0x8] sm:$0xf]
  %v38 = vld [vmem:[%s1 + $0xc] sm:$0xf]
  %v39 = vld [vmem:[%s1 + $0x10] sm:$0xf]
  %v40 = vld [vmem:[%s1 + $0x14] sm:$0xf]
  %v41 = vld [vmem:[%s1 + $0x18] sm:$0xf]
  %v42 = vld [vmem:[%s1 + $0x1c] sm:$0xf]
  %v43 = vld [vmem:[%s1 + $0x20] sm:$0xf]
  %v44 = vld [vmem:[%s1 + $0x24] sm:$0xf]
  %v45 = vld [vmem:[%s1 + $0x28] sm:$0xf]
  %v46 = vld [vmem:[%s1 + $0x2c] sm:$0xf]
  %v47 = vld [vmem:[%s1 + $0x30] sm:$0xf]
  %v48 = vld [vmem:[%s1 + $0x34] sm:$0xf]
  %v49 = vld [vmem:[%s1 + $0x38] sm:$0xf]
  %v50 = vld [vmem:[%s1 + $0x3c] sm:$0xf]
  %v51 = vld [vmem:[%s2] sm:$0x1]
  %v53 = vlaneseq
  %v54 = vshrl.u32 %v53, 7
  %v55 = vsub.s32 0, %v54
  %v56 = vrot.slane %v51, %v55
  %v74 = vunpack.c.l.b16 %v35
  %v75 = vunpack.c.l.b16 %v36
  %v76 = vunpack.c.l.b16 %v37
  %v77 = vunpack.c.l.b16 %v38
  %v78 = vunpack.c.l.b16 %v39
  %v79 = vunpack.c.l.b16 %v40
  %v80 = vunpack.c.l.b16 %v41
  %v81 = vunpack.c.l.b16 %v42
  %v82 = vunpack.c.l.b16 %v43
  %v83 = vunpack.c.l.b16 %v44
  %v84 = vunpack.c.l.b16 %v45
  %v85 = vunpack.c.l.b16 %v46
  %v86 = vunpack.c.l.b16 %v47
  %v87 = vunpack.c.l.b16 %v48
  %v88 = vunpack.c.l.b16 %v49
  %v89 = vunpack.c.l.b16 %v50
  %v90 = vpack.c.b16 %v75, %v74
  %v91 = vpack.c.b16 %v77, %v76
  %v92 = vpack.c.b16 %v79, %v78
  %v93 = vpack.c.b16 %v81, %v80
  %v94 = vpack.c.b16 %v83, %v82
  %v95 = vpack.c.b16 %v85, %v84
  %v96 = vpack.c.b16 %v87, %v86
  %v97 = vpack.c.b16 %v89, %v88
  %106 = vmatprep.subr.bf16.mxu0 0
  %107 = vmatpush1.bf16.msra.mxu0 %v90
  %108 = vmatprep.subr.bf16.mxu0 0
  %109 = vmatpush1.bf16.msra.mxu0 %v91
  %110 = vmatprep.subr.bf16.mxu0 0
  %111 = vmatpush1.bf16.msra.mxu0 %v92
  %112 = vmatprep.subr.bf16.mxu0 0
  %113 = vmatpush1.bf16.msra.mxu0 %v93
  %114 = vmatprep.subr.bf16.mxu0 0
  %115 = vmatpush1.bf16.msra.mxu0 %v94
  %116 = vmatprep.subr.bf16.mxu0 0
  %117 = vmatpush1.bf16.msra.mxu0 %v95
  %118 = vmatprep.subr.bf16.mxu0 0
  %119 = vmatpush1.bf16.msra.mxu0 %v96
  %120 = vmatprep.subr.bf16.mxu0 0
  %121 = vmatpush1.bf16.msra.mxu0 %v97
  %122 = vmatprep.subr.bf16.mxu0 0
  %123 = vmatpush1.bf16.msra.mxu0 0
  %124 = vmatprep.subr.bf16.mxu0 0
  %125 = vmatpush1.bf16.msra.mxu0 0
  %126 = vmatprep.subr.bf16.mxu0 0
  %127 = vmatpush1.bf16.msra.mxu0 0
  %128 = vmatprep.subr.bf16.mxu0 0
  %129 = vmatpush1.bf16.msra.mxu0 0
  %130 = vmatprep.subr.bf16.mxu0 0
  %131 = vmatpush1.bf16.msra.mxu0 0
  %132 = vmatprep.subr.bf16.mxu0 0
  %133 = vmatpush1.bf16.msra.mxu0 0
  %134 = vmatprep.subr.bf16.mxu0 0
  %135 = vmatpush1.bf16.msra.mxu0 0
  %136 = vmatprep.subr.bf16.mxu0 0
  %137 = vmatpush1.bf16.msra.mxu0 0
  %138 = vmatprep.mubr.bf16.mxu0 0
  %139 = vmatmul.mubr.bf16.gmra.mrb[0].mxu0 %v34
  %v140 = vpop.f32.mrb[0].mxu0
  %v141 = vadd.f32 %v56, %v140
  %v142 = vpop.f32.mrb[0].mxu0
  %v143 = vpop.f32.mrb[0].mxu0
  %v144 = vpop.f32.mrb[0].mxu0
  %145 = vdwg.mxu0
  %vm148 = vcmask 1040384
  %v149 = vrot.slane %v32, 7
  %v150 = vrot.slane %v141, 7
  %v151 = vsel %vm148, %v149, %v150
  %v153 = vadd.f32 %v141, %v151
  %vm154 = vcmask 1041408
  %v155 = vrot.slane %v32, 6
  %v156 = vrot.slane %v141, 6
  %v157 = vsel %vm154, %v155, %v156
  %v159 = vadd.f32 %v153, %v157
  %160 = vadd.xlane.f32.xlu0 %v159
  %v161 = vpop.xlane.xlu0 %160
  %v162 = vmul.f32 %v161, 0.0078125
  %v163 = vsub.f32 %v159, %v162
  %v164 = vmul.f32 %v163, %v163
  %165 = vadd.xlane.f32.xlu0 %v164
  %v166 = vpop.xlane.xlu0 %165
  %v167 = vmul.f32 %v166, 0.0078125
  %v168 = vadd.f32 %v167, 1e-05
  %v169 = vrsqrt.pop %v168
  %v170 = vmul.f32 %v163, %v169
  %v171 = vld [vmem:[%s3] sm:$0x1]
  %v173 = vlaneseq
  %v174 = vshrl.u32 %v173, 7
  %v175 = vsub.s32 0, %v174
  %v176 = vrot.slane %v171, %v175
  %v178 = vmul.f32 %v170, %v176
  %v179 = vld [vmem:[%s4] sm:$0x1]
  %v181 = vlaneseq
  %v182 = vshrl.u32 %v181, 7
  %v183 = vsub.s32 0, %v182
  %v184 = vrot.slane %v179, %v183
  %v186 = vadd.f32 %v178, %v184
  %v187 = vmax.f32 %v186, 0.0
  %v188 = vadd.f32 %v187, %v33
  %v189 = vmax.f32 %v188, 0.0
  %190 = vst [vmem:[%s6] sm:$0xff] %v189
  // Predicated region
  $region30: #{online_layer_forward.1} parent=0 // pred_check
    %p191 = pneg %p26
  $region31: #{online_layer_forward.1} parent=0 // pred_check_branch
    %193 = sbr.rel (%p191) target = $region33
  $region32: #{online_layer_forward.1} parent=0 // pred_region
    %194 = vst [vmem:[%s7 - $0x5] sm:$0xe0] %v141
  $region33: #{online_layer_forward.1} parent=0 // pred_fallthru
    _
  %p195 = scmp.lt.s32.totalorder 0, 0
  // Predicated region
  $region34: #{online_layer_forward.1} parent=0 // pred_check
    %p196 = pneg %p195
  $region35: #{online_layer_forward.1} parent=0 // pred_check_branch
    %198 = sbr.rel (%p196) target = $region37
  $region36: #{online_layer_forward.1} parent=0 // pred_region
    %199 = vst [vmem:[#allocation2] sm:$0xff] %v141
  $region37: #{online_layer_forward.1} parent=0 // pred_fallthru
    _
  // Predicated region
  $region38: #{online_layer_forward.1} parent=0 // pred_check
    _
  $region39: #{online_layer_forward.1} parent=0 // pred_check_branch
    %201 = sbr.rel (0) target = $region41
  $region40: #{online_layer_forward.1} parent=0 // pred_region
    _
  $region41: #{online_layer_forward.1} parent=0 // pred_fallthru
    _
  // Predicated region
  $region42: #{online_layer_forward.1} parent=0 // pred_check
    _
  $region43: #{online_layer_forward.1} parent=0 // pred_check_branch
    %203 = sbr.rel (0) target = $region45
  $region44: #{online_layer_forward.1} parent=0 // pred_region
    _
  $region45: #{online_layer_forward.1} parent=0 // pred_fallthru
    _
  // Predicated region
  $region46: #{online_layer_forward.1} parent=0 // pred_check
    _
  $region47: #{online_layer_forward.1} parent=0 // pred_check_branch
    %205 = sbr.rel (0) target = $region49
  $region48: #{online_layer_forward.1} parent=0 // pred_region
    _
  $region49: #{online_layer_forward.1} parent=0 // pred_fallthru
    _
  // Predicated region
  $region50: #{online_layer_forward.1} parent=0 // pred_check
    _
  $region51: #{online_layer_forward.1} parent=0 // pred_check_branch
    %207 = sbr.rel (0) target = $region53
  $region52: #{online_layer_forward.1} parent=0 // pred_region
    _
  $region53: #{online_layer_forward.1} parent=0 // pred_fallthru
    _

</llo_original>
